<compile_context>
chip_gen: v7x
topology: tpu7x:2x2x1
jax: 0.10.0
libtpu: 0.0.40
codegen_flags: <defaults>
</compile_context>

<pallas_src>
import functools

import jax
import jax.numpy as jnp
from jax.experimental import pallas as pl
from jax.experimental.pallas import tpu as pltpu

EPS = 1e-5  # nn.LayerNorm default


# --------------------------------------------------------------------------- kernels
def _ln_rows(x, gamma, beta, inv_d):
    """LayerNorm over the last dim of a (tile_rows, D) block, f32 accumulation.

    One-pass statistics (sum and sum-of-squares) instead of mean followed by a second
    reduction over (x - mu)^2 — halves the cross-lane (XLU) reduction work.  The rsqrt
    lands on the EUP slot; gamma/beta stay (1, D) so the broadcast fuses into the
    multiply/add.  All row-local, so garbage rows from a partial last block never
    contaminate valid rows.
    """
    xf = x.astype(jnp.float32)
    s = jnp.sum(xf, axis=-1, keepdims=True)
    sq = jnp.sum(xf * xf, axis=-1, keepdims=True)
    mu = s * inv_d
    var = jnp.maximum(sq * inv_d - mu * mu, 0.0)   # biased var (PyTorch), guard cancellation
    rstd = jax.lax.rsqrt(var + EPS)
    return (xf - mu) * rstd * gamma + beta


def _prenorm2_kernel(x_ref, x2_ref, g_ref, b_ref, o1_ref, o2_ref, *, inv_d):
    gamma = g_ref[...].astype(jnp.float32)   # (1, D)
    beta = b_ref[...].astype(jnp.float32)    # (1, D)
    o1_ref[...] = _ln_rows(x_ref[...], gamma, beta, inv_d).astype(o1_ref.dtype)
    o2_ref[...] = _ln_rows(x2_ref[...], gamma, beta, inv_d).astype(o2_ref.dtype)


def _prenorm2_fused_kernel(x_ref, x2_ref, g_ref, b_ref, o_ref, *, inv_d, fuse_fn):
    """Same as above but the elementwise `fn` is fused into the epilogue:
    writes fn(LN(x), LN(x2)) directly — one HBM write instead of two writes + two
    re-reads + one write for a separate fn pass."""
    gamma = g_ref[...].astype(jnp.float32)
    beta = b_ref[...].astype(jnp.float32)
    n1 = _ln_rows(x_ref[...], gamma, beta, inv_d)
    n2 = _ln_rows(x2_ref[...], gamma, beta, inv_d)
    o_ref[...] = fuse_fn(n1, n2).astype(o_ref.dtype)


# ----------------------------------------------------------------------- tile sizing
def _round_up(v, m):
    return ((v + m - 1) // m) * m


def _vmem_capacity_bytes():
    try:
        return int(pltpu.get_tpu_info().vmem_capacity_bytes)
    except Exception:  # pragma: no cover - fall back to smallest (v7x) physical VMEM
        return 64 * 1024 * 1024


def _num_tensorcores():
    """Best-effort TensorCore count (2 on v7x, 1 on v5e/v6e); default 1 if unknown."""
    try:
        info = pltpu.get_tpu_info()
        for attr in ("num_cores", "num_tensorcores", "tensorcore_count", "core_count"):
            v = getattr(info, attr, None)
            if v is not None:
                return max(1, int(v))
    except Exception:
        pass
    try:
        return max(1, int(getattr(jax.devices()[0], "num_cores", 1)))
    except Exception:
        return 1


def _pick_tile_rows(rows, d, itemsize, n_streamed_arrays):
    """Pick tile_rows from a VMEM budget; generation-aware via get_tpu_info()."""
    # sublane granularity: 8 rows for 32-bit, 16 for 16-bit, 32 for 8-bit dtypes
    sub = 8 * max(1, 4 // itemsize)
    vmem_cap = _vmem_capacity_bytes()
    budget = vmem_cap // 4                       # headroom for regalloc / f32 temporaries

    # The kernel upcasts each block to f32 (xf, xf*xf, normalized result), so the
    # working set per row is governed by max(itemsize, 4), not the streamed itemsize.
    eff_itemsize = max(itemsize, 4)
    per_row = n_streamed_arrays * 2 * d * eff_itemsize   # x2 pipeline buffers each
    tile = max(sub, budget // per_row)

    # Per-buffer byte target instead of a fixed row cap: ~1 MiB blocks sit on the HBM
    # roofline plateau on v5e/v6e; v7x (64 MiB VMEM, ~3.2 TB/s HBM) wants ~2 MiB blocks
    # so per-step overhead stays hidden.
    target_block_bytes = 2 * 1024 * 1024 if vmem_cap <= 64 * 1024 * 1024 else 1024 * 1024
    tile = min(tile, max(sub, target_block_bytes // max(1, d * itemsize)))

    tile = min(tile, _round_up(rows, sub))       # never bigger than the (padded) input
    # Only split small problems into >=2 grid steps where the parallel axis actually
    # shards across TensorCores (v7x); on single-TC chips it just adds step overhead.
    if _num_tensorcores() > 1 and rows > sub:
        tile = min(tile, _round_up(pl.cdiv(rows, 2), sub))
    tile = max(sub, (tile // sub) * sub)

    vmem_limit = min(vmem_cap // 2, 128 * 1024 * 1024)
    return tile, vmem_limit


# --------------------------------------------------------------------------- wrapper
def dual_layernorm(x, x2, gamma, beta, *, fuse_fn=None, tile_rows=None):
    """LayerNorm(D) applied to x and x2, both (B, N, D), in one Pallas kernel.

    If `fuse_fn` (an elementwise binary fn) is given, the kernel returns
    fuse_fn(LN(x), LN(x2)) directly; otherwise it returns (LN(x), LN(x2)).
    """
    assert x.shape == x2.shape
    B, N, D = x.shape
    rows = B * N
    dtype = x.dtype
    itemsize = jnp.dtype(dtype).itemsize
    n_out = 1 if fuse_fn is not None else 2
    n_streamed = 2 + n_out                       # x, x2 + outputs

    if tile_rows is None:
        tile_rows, vmem_limit = _pick_tile_rows(rows, D, itemsize, n_streamed)
    else:
        # Clamp to half the *detected* physical VMEM (64 MiB is the whole chip on v7x).
        vmem_limit = min(_vmem_capacity_bytes() // 2, 128 * 1024 * 1024)

    grid_steps = pl.cdiv(rows, tile_rows)

    # No jnp.pad / output slicing: Pallas handles the partial last block itself
    # (garbage OOB reads are discarded by the row-local LN; OOB stores are masked).
    xf = x.reshape(rows, D)
    x2f = x2.reshape(rows, D)
    g2 = gamma.reshape(1, D)
    b2 = beta.reshape(1, D)

    # NOTE: D should be a multiple of 128 for lane-dense (unmasked) stores; an odd
    # model dim still works but eats masked vst.msk partial-store throughput.
    row_spec = pl.BlockSpec((tile_rows, D), lambda i: (i, 0))
    par_spec = pl.BlockSpec((1, D), lambda i: (0, 0))

    inv_d = 1.0 / float(D)
    cost = pl.CostEstimate(
        flops=2 * 10 * rows * D,                 # two LN passes, ~10 flops/elem
        transcendentals=2 * rows,                # one rsqrt per row per input
        bytes_accessed=n_streamed * rows * D * itemsize,
    )
    cparams = pltpu.CompilerParams(
        dimension_semantics=("parallel",),
        vmem_limit_bytes=int(vmem_limit),
    )

    if fuse_fn is not None:
        out = pl.pallas_call(
            functools.partial(_prenorm2_fused_kernel, inv_d=inv_d, fuse_fn=fuse_fn),
            out_shape=jax.ShapeDtypeStruct((rows, D), dtype),
            grid_spec=pltpu.PrefetchScalarGridSpec(
                num_scalar_prefetch=0,
                grid=(grid_steps,),
                in_specs=[row_spec, row_spec, par_spec, par_spec],
                out_specs=row_spec,
            ),
            compiler_params=cparams,
            cost_estimate=cost,
        )(xf, x2f, g2, b2)
        return out.reshape(B, N, D)

    o1, o2 = pl.pallas_call(
        functools.partial(_prenorm2_kernel, inv_d=inv_d),
        out_shape=(
            jax.ShapeDtypeStruct((rows, D), dtype),
            jax.ShapeDtypeStruct((rows, D), x2.dtype),
        ),
        grid_spec=pltpu.PrefetchScalarGridSpec(
            num_scalar_prefetch=0,
            grid=(grid_steps,),
            in_specs=[row_spec, row_spec, par_spec, par_spec],
            out_specs=[row_spec, row_spec],
        ),
        compiler_params=cparams,
        cost_estimate=cost,
    )(xf, x2f, g2, b2)
    return o1.reshape(B, N, D), o2.reshape(B, N, D)


class PreNorm2:
    """JAX/Pallas port of PreNorm2: fn(norm(x), norm(x2), **kwargs)."""

    def __init__(self, dim, fn, fn_is_elementwise=False):
        self.dim = dim
        self.fn = fn
        # If `fn` is a pure elementwise binary op, it is fused into the LayerNorm
        # kernel epilogue (saves HBM round trips).  Same callable is used on both
        # paths so the two can never diverge.
        self.fn_is_elementwise = fn_is_elementwise
        # nn.LayerNorm default init: weight = ones, bias = zeros (deterministic).
        self.gamma = jnp.ones((dim,), jnp.float32)
        self.beta = jnp.zeros((dim,), jnp.float32)

    def __call__(self, x, x2, **kwargs):
        if self.fn_is_elementwise and not kwargs:
            return dual_layernorm(x, x2, self.gamma, self.beta, fuse_fn=self.fn)
        # TODO(synk): for the production PA_Former case where `fn` is cross-attention,
        # fold _ln_rows into the consumer's QKV-projection matmul prologue instead of
        # materializing LN(x)/LN(x2) to HBM (removes ~2 full HBM passes).
        nx, nx2 = dual_layernorm(x, x2, self.gamma, self.beta)
        return self.fn(nx, nx2, **kwargs)


# ------------------------------------------------------------------------------ main
if __name__ == "__main__":
    def _ref_ln(v):
        mu = jnp.mean(v, axis=-1, keepdims=True)
        var = jnp.mean((v - mu) ** 2, axis=-1, keepdims=True)
        return (v - mu) / jnp.sqrt(var + EPS)

    key = jax.random.PRNGKey(0)
    placeholder_fn = lambda a, b: a + b  # stand-in for the user-supplied `fn`

    # Case 1: small shapes consistent with the module: (batch, seq, dim), D = 128
    # keeps the output lane-dense (full-width vst, no masked stores).
    B, N, D = 2, 8, 128
    k1, k2 = jax.random.split(key)
    x = jax.random.normal(k1, (B, N, D), jnp.float32)
    x2 = jax.random.normal(k2, (B, N, D), jnp.float32)

    module_fused = PreNorm2(D, placeholder_fn, fn_is_elementwise=True)
    out_fused = jax.block_until_ready(module_fused(x, x2))

    module_generic = PreNorm2(D, placeholder_fn)
    out_generic = jax.block_until_ready(module_generic(x, x2))

    ref = _ref_ln(x) + _ref_ln(x2)
    assert jnp.allclose(out_fused, ref, atol=1e-4, rtol=1e-4), "fused mismatch vs reference"
    assert jnp.allclose(out_generic, ref, atol=1e-4, rtol=1e-4), "generic mismatch vs reference"

    # Case 2: ragged row count — exercises the no-pad partial-last-block path
    # (OOB reads discarded, OOB stores masked).
    B2, N2 = 2, 9                                 # rows = 18, not a sublane multiple
    k3, k4 = jax.random.split(k2)
    y = jax.random.normal(k3, (B2, N2, D), jnp.float32)
    y2 = jax.random.normal(k4, (B2, N2, D), jnp.float32)
    out_ragged = jax.block_until_ready(module_fused(y, y2))
    ref_ragged = _ref_ln(y) + _ref_ln(y2)
    assert jnp.allclose(out_ragged, ref_ragged, atol=1e-4, rtol=1e-4), "ragged mismatch vs reference"

    print("KERNEL_OK")
</pallas_src>

<mosaic_0001>
module attributes {stable_mosaic.version = 11 : i64} {
  func.func @_prenorm2_fused_kernel(%arg0: i32, %arg1: memref<16x128xf32, #tpu.memory_space<vmem>>, %arg2: memref<16x128xf32, #tpu.memory_space<vmem>>, %arg3: memref<1x128xf32, #tpu.memory_space<vmem>>, %arg4: memref<1x128xf32, #tpu.memory_space<vmem>>, %arg5: memref<16x128xf32, #tpu.memory_space<vmem>>) attributes {dimension_semantics = [#tpu.dimension_semantics<parallel>], iteration_bounds = array<i64: 1>, scalar_prefetch = 0 : i64, scratch_operands = 0 : i64, tpu.core_type = #tpu.core_type<tc>, window_params = [{transform_indices = @transform_0, window_bounds = array<i64: 16, 128>}, {transform_indices = @transform_1, window_bounds = array<i64: 16, 128>}, {pipeline_mode = #tpu.pipeline_mode<synchronous>, transform_indices = @transform_2, window_bounds = array<i64: 1, 128>}, {pipeline_mode = #tpu.pipeline_mode<synchronous>, transform_indices = @transform_3, window_bounds = array<i64: 1, 128>}, {transform_indices = @transform_4, window_bounds = array<i64: 16, 128>}]} {
    %c0 = arith.constant 0 : index
    %c0_0 = arith.constant 0 : index
    %0 = vector.load %arg3[%c0, %c0_0] : memref<1x128xf32, #tpu.memory_space<vmem>>, vector<1x128xf32>
    %c0_1 = arith.constant 0 : index
    %c0_2 = arith.constant 0 : index
    %1 = vector.load %arg4[%c0_1, %c0_2] : memref<1x128xf32, #tpu.memory_space<vmem>>, vector<1x128xf32>
    %c0_3 = arith.constant 0 : index
    %c0_4 = arith.constant 0 : index
    %2 = vector.load %arg1[%c0_3, %c0_4] : memref<16x128xf32, #tpu.memory_space<vmem>>, vector<16x128xf32>
    %cst = arith.constant dense<0.000000e+00> : vector<16xf32>
    %3 = vector.multi_reduction <add>, %2, %cst [1] : vector<16x128xf32> to vector<16xf32>
    %4 = vector.shape_cast %3 : vector<16xf32> to vector<16x1xf32>
    %5 = arith.mulf %2, %2 : vector<16x128xf32>
    %cst_5 = arith.constant dense<0.000000e+00> : vector<16xf32>
    %6 = vector.multi_reduction <add>, %5, %cst_5 [1] : vector<16x128xf32> to vector<16xf32>
    %7 = vector.shape_cast %6 : vector<16xf32> to vector<16x1xf32>
    %cst_6 = arith.constant 7.812500e-03 : f32
    %8 = vector.broadcast %cst_6 : f32 to vector<16x1xf32>
    %9 = arith.mulf %4, %8 : vector<16x1xf32>
    %cst_7 = arith.constant 7.812500e-03 : f32
    %10 = vector.broadcast %cst_7 : f32 to vector<16x1xf32>
    %11 = arith.mulf %7, %10 : vector<16x1xf32>
    %12 = arith.mulf %9, %9 : vector<16x1xf32>
    %13 = arith.subf %11, %12 : vector<16x1xf32>
    %cst_8 = arith.constant 0.000000e+00 : f32
    %14 = vector.broadcast %cst_8 : f32 to vector<16x1xf32>
    %15 = arith.maximumf %13, %14 : vector<16x1xf32>
    %cst_9 = arith.constant 9.99999974E-6 : f32
    %16 = vector.broadcast %cst_9 : f32 to vector<16x1xf32>
    %17 = arith.addf %15, %16 : vector<16x1xf32>
    %18 = math.rsqrt %17 : vector<16x1xf32>
    %19 = vector.broadcast %9 : vector<16x1xf32> to vector<16x128xf32>
    %20 = arith.subf %2, %19 : vector<16x128xf32>
    %21 = vector.broadcast %18 : vector<16x1xf32> to vector<16x128xf32>
    %22 = arith.mulf %20, %21 : vector<16x128xf32>
    %23 = vector.broadcast %0 : vector<1x128xf32> to vector<16x128xf32>
    %24 = arith.mulf %22, %23 : vector<16x128xf32>
    %25 = vector.broadcast %1 : vector<1x128xf32> to vector<16x128xf32>
    %26 = arith.addf %24, %25 : vector<16x128xf32>
    %c0_10 = arith.constant 0 : index
    %c0_11 = arith.constant 0 : index
    %27 = vector.load %arg2[%c0_10, %c0_11] : memref<16x128xf32, #tpu.memory_space<vmem>>, vector<16x128xf32>
    %cst_12 = arith.constant dense<0.000000e+00> : vector<16xf32>
    %28 = vector.multi_reduction <add>, %27, %cst_12 [1] : vector<16x128xf32> to vector<16xf32>
    %29 = vector.shape_cast %28 : vector<16xf32> to vector<16x1xf32>
    %30 = arith.mulf %27, %27 : vector<16x128xf32>
    %cst_13 = arith.constant dense<0.000000e+00> : vector<16xf32>
    %31 = vector.multi_reduction <add>, %30, %cst_13 [1] : vector<16x128xf32> to vector<16xf32>
    %32 = vector.shape_cast %31 : vector<16xf32> to vector<16x1xf32>
    %cst_14 = arith.constant 7.812500e-03 : f32
    %33 = vector.broadcast %cst_14 : f32 to vector<16x1xf32>
    %34 = arith.mulf %29, %33 : vector<16x1xf32>
    %cst_15 = arith.constant 7.812500e-03 : f32
    %35 = vector.broadcast %cst_15 : f32 to vector<16x1xf32>
    %36 = arith.mulf %32, %35 : vector<16x1xf32>
    %37 = arith.mulf %34, %34 : vector<16x1xf32>
    %38 = arith.subf %36, %37 : vector<16x1xf32>
    %cst_16 = arith.constant 0.000000e+00 : f32
    %39 = vector.broadcast %cst_16 : f32 to vector<16x1xf32>
    %40 = arith.maximumf %38, %39 : vector<16x1xf32>
    %cst_17 = arith.constant 9.99999974E-6 : f32
    %41 = vector.broadcast %cst_17 : f32 to vector<16x1xf32>
    %42 = arith.addf %40, %41 : vector<16x1xf32>
    %43 = math.rsqrt %42 : vector<16x1xf32>
    %44 = vector.broadcast %34 : vector<16x1xf32> to vector<16x128xf32>
    %45 = arith.subf %27, %44 : vector<16x128xf32>
    %46 = vector.broadcast %43 : vector<16x1xf32> to vector<16x128xf32>
    %47 = arith.mulf %45, %46 : vector<16x128xf32>
    %48 = vector.broadcast %0 : vector<1x128xf32> to vector<16x128xf32>
    %49 = arith.mulf %47, %48 : vector<16x128xf32>
    %50 = vector.broadcast %1 : vector<1x128xf32> to vector<16x128xf32>
    %51 = arith.addf %49, %50 : vector<16x128xf32>
    %52 = arith.addf %26, %51 : vector<16x128xf32>
    %c0_18 = arith.constant 0 : index
    %c0_19 = arith.constant 0 : index
    %53 = vector.load %arg5[%c0_18, %c0_19] : memref<16x128xf32, #tpu.memory_space<vmem>>, vector<16x128xf32>
    tpu.vector_store %arg5[%c0_18, %c0_19], %52 {strides = array<i32>} : memref<16x128xf32, #tpu.memory_space<vmem>>, vector<16x128xf32>,
    return
  }
  func.func @transform_0(%arg0: i32) -> (i32, i32) {
    %c0_i32 = arith.constant 0 : i32
    %c0_i32_0 = arith.constant 0 : i32
    return %arg0, %c0_i32 : i32, i32
  }
  func.func @transform_1(%arg0: i32) -> (i32, i32) {
    %c0_i32 = arith.constant 0 : i32
    %c0_i32_0 = arith.constant 0 : i32
    return %arg0, %c0_i32 : i32, i32
  }
  func.func @transform_2(%arg0: i32) -> (i32, i32) {
    %c0_i32 = arith.constant 0 : i32
    %c0_i32_0 = arith.constant 0 : i32
    %c0_i32_1 = arith.constant 0 : i32
    return %c0_i32, %c0_i32_0 : i32, i32
  }
  func.func @transform_3(%arg0: i32) -> (i32, i32) {
    %c0_i32 = arith.constant 0 : i32
    %c0_i32_0 = arith.constant 0 : i32
    %c0_i32_1 = arith.constant 0 : i32
    return %c0_i32, %c0_i32_0 : i32, i32
  }
  func.func @transform_4(%arg0: i32) -> (i32, i32) {
    %c0_i32 = arith.constant 0 : i32
    %c0_i32_0 = arith.constant 0 : i32
    return %arg0, %c0_i32 : i32, i32
  }
}

</mosaic_0001>

<llo_original>
// kernel: tpu_custom_call.1
$region0: #{tpu_custom_call.1}
  #allocation0 [shape = 'u32[]', space=smem, size = 0x4, offset = 0x4, fixed_abs, tag = 'smem constant byte address 0x4 - core index']
  #allocation1 [shape = 'u32[144,128]{1,0:T(1,128)}', space=vmem, size = 0x12000, scoped, tag = 'internal scratch']
  %s0 = inlined_call_operand.hbm [shape: f32[16,128], index: 0, kind: input, shape index: {}]
  %s1 = inlined_call_operand.hbm [shape: f32[16,128], index: 1, kind: input, shape index: {}]
  %s2 = inlined_call_operand.vmem [shape: f32[1,128], index: 2, kind: input, shape index: {}]
  %s3 = inlined_call_operand.vmem [shape: f32[1,128], index: 3, kind: input, shape index: {}]
  %s4 = inlined_call_operand.hbm [shape: f32[16,128], index: 4, kind: output, shape index: {}]
  %s5 = sld [smem:[#allocation0]]
  $region34: #{tpu_custom_call.1} parent=0
    _
  %s7 = ssub.s32 1, %s5
  %s8 = scalar_select 0, %s7, %s5
  $region1: #{tpu_custom_call.1} parent=0
    #allocation2 [shape = 'u8[8192]{0}', space=vmem, size = 0x2000, scoped, tag = 'input window, operand 0, single buffered']
    #allocation3 [shape = 's32[1]{0}', space=sflag, size = 0x4, scoped, tag = 'scoped memory for tpu_custom_call.1']
    #allocation4 [shape = 's32[1]{0}', space=sflag, size = 0x4, scoped, tag = 'scoped memory for tpu_custom_call.1']
    #allocation5 [shape = 'u8[8192]{0}', space=vmem, size = 0x2000, scoped, tag = 'input window, operand 1, single buffered']
    #allocation6 [shape = 's32[1]{0}', space=sflag, size = 0x4, scoped, tag = 'scoped memory for tpu_custom_call.1']
    #allocation7 [shape = 'u8[8192]{0}', space=vmem, size = 0x2000, scoped, tag = 'output window, operand 0, single buffered']
    %9 = vsyncpa [#allocation3], 0
    %10 = vsyncpa [#allocation6], 0
    %11 = vsyncpa [#allocation4], 0
    // Predicated region
    $region2: #{tpu_custom_call.1} parent=1 // pred_check
      _
    $region3: #{tpu_custom_call.1} parent=1 // pred_check_branch
      %13 = sbr.rel (0) target = $region5
    $region4: #{tpu_custom_call.1} parent=1 // pred_region
      %s15 = ssub.s32 256, 256
      %16 = vsyncadd [#allocation3], %s15
      %s17 = sshll.u32 [#allocation2], 4
      %s18 = int_to_ptr.vmem [resolvable:$true] %s17
      %23 = dma.hbm_to_vmem [thread:$0]  %s0, 256, %s18, [#allocation3], 128, 128, 8
    $region5: #{tpu_custom_call.1} parent=1 // pred_fallthru
      _
    // Predicated region
    $region6: #{tpu_custom_call.1} parent=1 // pred_check
      _
    $region7: #{tpu_custom_call.1} parent=1 // pred_check_branch
      %25 = sbr.rel (0) target = $region9
    $region8: #{tpu_custom_call.1} parent=1 // pred_region
      %s27 = ssub.s32 256, 256
      %28 = vsyncadd [#allocation6], %s27
      %s29 = sshll.u32 [#allocation5], 4
      %s30 = int_to_ptr.vmem [resolvable:$true] %s29
      %35 = dma.hbm_to_vmem [thread:$0]  %s1, 256, %s30, [#allocation6], 128, 128, 8
    $region9: #{tpu_custom_call.1} parent=1 // pred_fallthru
      _
    // Predicated region
    $region10: #{tpu_custom_call.1} parent=1 // pred_check
      _
    $region11: #{tpu_custom_call.1} parent=1 // pred_check_branch
      %37 = sbr.rel (0) target = $region13
    $region12: #{tpu_custom_call.1} parent=1 // pred_region
      _
    $region13: #{tpu_custom_call.1} parent=1 // pred_fallthru
      _
    // Predicated region
    $region14: #{tpu_custom_call.1} parent=1 // pred_check
      _
    $region15: #{tpu_custom_call.1} parent=1 // pred_check_branch
      %39 = sbr.rel (0) target = $region17
    $region16: #{tpu_custom_call.1} parent=1 // pred_region
      _
    $region17: #{tpu_custom_call.1} parent=1 // pred_fallthru
      _
    // Predicated region
    $region18: #{tpu_custom_call.1} parent=1 // pred_check
      _
    $region19: #{tpu_custom_call.1} parent=1 // pred_check_branch
      %41 = sbr.rel (0) target = $region21
    $region20: #{tpu_custom_call.1} parent=1 // pred_region
      %42 = dma.done [#allocation3], 256
    $region21: #{tpu_custom_call.1} parent=1 // pred_fallthru
      _
    // Predicated region
    $region22: #{tpu_custom_call.1} parent=1 // pred_check
      _
    $region23: #{tpu_custom_call.1} parent=1 // pred_check_branch
      %44 = sbr.rel (0) target = $region25
    $region24: #{tpu_custom_call.1} parent=1 // pred_region
      %45 = dma.done [#allocation6], 256
    $region25: #{tpu_custom_call.1} parent=1 // pred_fallthru
      _
    %v46 = vld [vmem:[%s2] sm:$0x1]
    %v47 = vld [vmem:[%s3] sm:$0x1]
    %v48 = vld [vmem:[#allocation2] sm:$0xff]
    %v49 = vld [vmem:[#allocation2 + $0x8] sm:$0xff]
    %50 = vadd.xlane.f32.xlu0 %v48
    %v51 = vpop.xlane.xlu0 %50
    %52 = vadd.xlane.f32.xlu0 %v49
    %v53 = vpop.xlane.xlu0 %52
    %v54 = vmul.f32 %v48, %v48
    %v55 = vmul.f32 %v49, %v49
    %56 = vadd.xlane.f32.xlu0 %v54
    %v57 = vpop.xlane.xlu0 %56
    %58 = vadd.xlane.f32.xlu0 %v55
    %v59 = vpop.xlane.xlu0 %58
    %v60 = vmul.f32 %v51, 0.0078125
    %v61 = vmul.f32 %v53, 0.0078125
    %v62 = vmul.f32 %v57, 0.0078125
    %v63 = vmul.f32 %v59, 0.0078125
    %v64 = vmul.f32 %v60, %v60
    %v65 = vmul.f32 %v61, %v61
    %v66 = vsub.f32 %v62, %v64
    %v67 = vsub.f32 %v63, %v65
    %v68 = vmax.f32 %v66, 0.0
    %v69 = vmax.f32 %v67, 0.0
    %v70 = vadd.f32 %v68, 1e-05
    %v71 = vadd.f32 %v69, 1e-05
    %v72 = vrsqrt.pop %v70
    %v73 = vrsqrt.pop %v71
    %v74 = vsub.f32 %v48, %v60
    %v75 = vsub.f32 %v49, %v61
    %v76 = vmul.f32 %v74, %v72
    %v77 = vmul.f32 %v75, %v73
    %v79 = vlaneseq
    %v80 = vshrl.u32 %v79, 7
    %v81 = vsub.s32 0, %v80
    %v82 = vrot.slane %v46, %v81
    %v84 = vmul.f32 %v76, %v82
    %v85 = vmul.f32 %v77, %v82
    %v87 = vlaneseq
    %v88 = vshrl.u32 %v87, 7
    %v89 = vsub.s32 0, %v88
    %v90 = vrot.slane %v47, %v89
    %v92 = vadd.f32 %v84, %v90
    %v93 = vadd.f32 %v85, %v90
    %v94 = vld [vmem:[#allocation5] sm:$0xff]
    %v95 = vld [vmem:[#allocation5 + $0x8] sm:$0xff]
    %96 = vadd.xlane.f32.xlu0 %v94
    %v97 = vpop.xlane.xlu0 %96
    %98 = vadd.xlane.f32.xlu0 %v95
    %v99 = vpop.xlane.xlu0 %98
    %v100 = vmul.f32 %v94, %v94
    %v101 = vmul.f32 %v95, %v95
    %102 = vadd.xlane.f32.xlu0 %v100
    %v103 = vpop.xlane.xlu0 %102
    %104 = vadd.xlane.f32.xlu0 %v101
    %v105 = vpop.xlane.xlu0 %104
    %v106 = vmul.f32 %v97, 0.0078125
    %v107 = vmul.f32 %v99, 0.0078125
    %v108 = vmul.f32 %v103, 0.0078125
    %v109 = vmul.f32 %v105, 0.0078125
    %v110 = vmul.f32 %v106, %v106
    %v111 = vmul.f32 %v107, %v107
    %v112 = vsub.f32 %v108, %v110
    %v113 = vsub.f32 %v109, %v111
    %v114 = vmax.f32 %v112, 0.0
    %v115 = vmax.f32 %v113, 0.0
    %v116 = vadd.f32 %v114, 1e-05
    %v117 = vadd.f32 %v115, 1e-05
    %v118 = vrsqrt.pop %v116
    %v119 = vrsqrt.pop %v117
    %v120 = vsub.f32 %v94, %v106
    %v121 = vsub.f32 %v95, %v107
    %v122 = vmul.f32 %v120, %v118
    %v123 = vmul.f32 %v121, %v119
    %v124 = vmul.f32 %v122, %v82
    %v125 = vmul.f32 %v123, %v82
    %v126 = vadd.f32 %v124, %v90
    %v127 = vadd.f32 %v125, %v90
    %v128 = vadd.f32 %v92, %v126
    %v129 = vadd.f32 %v93, %v127
    %130 = vst [vmem:[#allocation7] sm:$0xff] %v128
    %131 = vst [vmem:[#allocation7 + $0x8] sm:$0xff] %v129
    // Predicated region
    $region26: #{tpu_custom_call.1} parent=1 // pred_check
      _
    $region27: #{tpu_custom_call.1} parent=1 // pred_check_branch
      %133 = sbr.rel (0) target = $region29
    $region28: #{tpu_custom_call.1} parent=1 // pred_region
      %s135 = ssub.s32 256, 256
      %136 = vsyncadd [#allocation4], %s135
      %s137 = sshll.u32 [#allocation7], 4
      %s138 = int_to_ptr.vmem [resolvable:$true] %s137
      %143 = dma.vmem_to_hbm [thread:$0]  %s138, 256, %s4, [#allocation4], 128, 128, 8
    $region29: #{tpu_custom_call.1} parent=1 // pred_fallthru
      _
    // Predicated region
    $region30: #{tpu_custom_call.1} parent=1 // pred_check
      _
    $region31: #{tpu_custom_call.1} parent=1 // pred_check_branch
      %145 = sbr.rel (0) target = $region33
    $region32: #{tpu_custom_call.1} parent=1 // pred_region
      %146 = dma.done [#allocation4], 256
    $region33: #{tpu_custom_call.1} parent=1 // pred_fallthru
      _
    %147 = vsyncpa [#allocation3], 1
    %148 = vsyncpa [#allocation6], 1
    %149 = vsyncpa [#allocation4], 1

</llo_original>
